<compile_context>
chip_gen: v5e
topology: v5e:2x2
jax: 0.10.0
libtpu: 0.0.40
codegen_flags: <defaults>
</compile_context>

<pallas_src>
import math

import jax
import jax.numpy as jnp
import numpy as np
from jax.experimental import pallas as pl
from jax.experimental.pallas import tpu as pltpu


_TARGET_BLOCK_BYTES = 2 << 20         # ~2 MiB payload per block (amortizes ~0.35 us/step)
_VMEM_LIMIT_CACHE = [None]
_NARROW_PATH_STATE = {1: "untested", 2: "untested"}   # per squeezed-axis: untested | ok | broken


def _round_up(x, m):
    return ((x + m - 1) // m) * m


def _vmem_limit_bytes():
    """Scoped-VMEM limit to request: ~half the physical per-core VMEM, clamped."""
    if _VMEM_LIMIT_CACHE[0] is None:
        phys = 64 << 20                       # conservative default (v7x-class part)
        try:
            info = pltpu.get_tpu_info()
            phys = int(getattr(info, "vmem_capacity_bytes", phys)) or phys
        except Exception:
            pass
        _VMEM_LIMIT_CACHE[0] = int(min(max(phys // 2, 32 << 20), 64 << 20))
    return _VMEM_LIMIT_CACHE[0]


def _sublane_tile(dtype):
    # 8 for f32, 16 for bf16, 32 for int8/fp8.
    return max(8, 32 // max(np.dtype(dtype).itemsize, 1))


def _padded_vmem_bytes(block_shape, dtype):
    """Padded VMEM footprint of one buffer: minor dim -> 128 lanes, 2nd-minor -> sublane tile."""
    dtype = np.dtype(dtype)
    dims = [int(d) for d in block_shape if d is not None]
    if not dims:
        return 4
    if len(dims) == 1:
        return _round_up(dims[0], 1024) * max(dtype.itemsize, 4)
    lanes = _round_up(dims[-1], 128)
    subs = _round_up(dims[-2], _sublane_tile(dtype))
    lead = 1
    for d in dims[:-2]:
        lead *= d
    return lead * subs * lanes * dtype.itemsize


# ----------------------------------------------------------------------------- kernels


def _copy_kernel(x_ref, o_ref):
    # Narrow-axis path: both refs are lane-dense (bt, t_d); pure data movement.
    o_ref[...] = x_ref[...]


def _swap_minor_kernel(x_ref, o_ref):
    # Dense path: (bt, t_a, t_b) -> (bt, t_b, t_a), batched 2-D XLU transpose per block.
    o_ref[...] = jnp.swapaxes(x_ref[...], 1, 2)


def _perm_kernel_factory(block_perm):
    def kernel(x_ref, o_ref):
        o_ref[...] = jnp.transpose(x_ref[...], block_perm)
    return kernel


# ----------------------------------------------------------------------------- grouped swap paths


def _dense_swap(x3):
    """(n, a, b) -> (n, b, a) with padded-aware tiling; safe for any a, b."""
    n, a, b = x3.shape
    dtype = x3.dtype
    itemsize = np.dtype(dtype).itemsize
    limit = _vmem_limit_bytes()
    budget = limit // 2                                   # headroom for compiler scratch

    t_a = a if a <= 512 else 512                          # 512: mult. of 8/128, ~MiB blocks
    t_b = b if b <= 512 else 512
    per_bt = (_padded_vmem_bytes((1, t_a, t_b), dtype) +
              _padded_vmem_bytes((1, t_b, t_a), dtype))
    max_bt = max(1, budget // (2 * per_bt))               # x2: double-buffered pipeline
    tgt_bt = max(1, _TARGET_BLOCK_BYTES // max(t_a * t_b * itemsize, 1))
    bt = int(min(n, max_bt, tgt_bt))

    grid = (pl.cdiv(n, bt), pl.cdiv(a, t_a), pl.cdiv(b, t_b))
    return pl.pallas_call(
        _swap_minor_kernel,
        out_shape=jax.ShapeDtypeStruct((n, b, a), dtype),
        grid_spec=pltpu.PrefetchScalarGridSpec(
            num_scalar_prefetch=0,
            grid=grid,
            in_specs=[pl.BlockSpec((bt, t_a, t_b), lambda i, j, k: (i, j, k))],
            out_specs=pl.BlockSpec((bt, t_b, t_a), lambda i, j, k: (i, k, j)),
        ),
        compiler_params=pltpu.CompilerParams(
            dimension_semantics=("parallel", "parallel", "parallel"),
            vmem_limit_bytes=limit,
        ),
        cost_estimate=pl.CostEstimate(
            flops=0, transcendentals=0, bytes_accessed=2 * x3.size * itemsize),
    )(x3)


def _narrow_swap(x3, narrow_axis):
    """(n, a, b) -> (n, b, a) where axis `narrow_axis` (1 = a, 2 = b) is narrow (< 128 lanes).

    The narrow axis is iterated by the grid with squeezed (size-1) block dims, so both
    VMEM buffers are lane-dense (bt, t_d) and the kernel is a pure copy (no XLU work,
    no lane padding).  The narrow side's HBM DMA is strided.
    """
    # TODO(synk): for sub-32-bit dtypes with narrow*itemsize <= 4 (uint8 C<=4, bf16 C<=2),
    # pack the narrow axis into one 32-bit lane with pltpu.bitcast and unpack with VPU
    # shifts in-kernel for a fully dense read AND write (zero DMA amplification).
    n, a, b = x3.shape
    dtype = x3.dtype
    itemsize = np.dtype(dtype).itemsize
    limit = _vmem_limit_bytes()
    budget = limit // 2

    narrow = b if narrow_axis == 2 else a
    dense = a if narrow_axis == 2 else b
    t_d = dense if dense <= 4096 else 4096                # long lane-dense rows -> long DMA runs
    row_bytes = _round_up(t_d, 128) * itemsize            # padded bytes per sublane row
    max_bt = max(1, budget // (4 * row_bytes))            # in+out buffers, double-buffered
    tgt_bt = max(1, _TARGET_BLOCK_BYTES // max(t_d * itemsize, 1))
    bt = int(min(n, max_bt, tgt_bt))

    grid = (pl.cdiv(n, bt), pl.cdiv(dense, t_d), narrow)
    if narrow_axis == 2:
        # NHWC -> NCHW direction: squeeze the input's minor axis (channels).
        in_spec = pl.BlockSpec((bt, t_d, None), lambda i, j, c: (i, j, c))
        out_spec = pl.BlockSpec((bt, None, t_d), lambda i, j, c: (i, c, j))
    else:
        # NCHW -> NHWC direction: squeeze the output's minor axis (channels).
        in_spec = pl.BlockSpec((bt, None, t_d), lambda i, j, c: (i, c, j))
        out_spec = pl.BlockSpec((bt, t_d, None), lambda i, j, c: (i, j, c))

    return pl.pallas_call(
        _copy_kernel,
        out_shape=jax.ShapeDtypeStruct((n, b, a), dtype),
        grid_spec=pltpu.PrefetchScalarGridSpec(
            num_scalar_prefetch=0, grid=grid,
            in_specs=[in_spec], out_specs=out_spec),
        compiler_params=pltpu.CompilerParams(
            dimension_semantics=("parallel", "parallel", "parallel"),
            vmem_limit_bytes=limit),
        cost_estimate=pl.CostEstimate(
            flops=0, transcendentals=0, bytes_accessed=2 * x3.size * itemsize),
    )(x3)


def _narrow_swap_checked(x3, narrow_axis):
    """Narrow-axis fast path, hardened: validate once per direction, else fall back."""
    if _NARROW_PATH_STATE[narrow_axis] == "broken":
        return None
    try:
        out3 = _narrow_swap(x3, narrow_axis)
        if _NARROW_PATH_STATE[narrow_axis] != "ok":
            # One-time validation: squeezed-minor block support differs across
            # Pallas/Mosaic versions; fall back silently if unsupported/incorrect.
            if bool(jnp.array_equal(out3, jnp.swapaxes(x3, 1, 2))):
                _NARROW_PATH_STATE[narrow_axis] = "ok"
            else:
                _NARROW_PATH_STATE[narrow_axis] = "broken"
                return None
        return out3
    except Exception:
        _NARROW_PATH_STATE[narrow_axis] = "broken"
        return None


def _grouped_swap_transpose(x, k, s, out_full_shape):
    n = math.prod(x.shape[:k])
    a = math.prod(x.shape[k:s])
    b = math.prod(x.shape[s:])
    x3 = x.reshape(n, a, b)                               # free reshape (no kernel work)
    if a == 1 or b == 1:
        return x3.reshape(out_full_shape)                 # pure reshape, no data movement
    out3 = None
    if min(a, b) < 128:
        out3 = _narrow_swap_checked(x3, 2 if b <= a else 1)
    if out3 is None:
        out3 = _dense_swap(x3)
    return out3.reshape(out_full_shape)                   # free reshape back to N-D


# ----------------------------------------------------------------------------- generic fallback


def _batched_perm_transpose(x, perm, out_full_shape):
    """Generic permutation that keeps axis 0: tile over batch, permute full slab."""
    n = x.shape[0]
    ndim = x.ndim
    dtype = x.dtype
    itemsize = np.dtype(dtype).itemsize
    limit = _vmem_limit_bytes()
    budget = limit // 2

    in_unit = _padded_vmem_bytes((1,) + tuple(x.shape[1:]), dtype)
    out_unit = _padded_vmem_bytes((1,) + tuple(out_full_shape[1:]), dtype)
    per_bt = 2 * (in_unit + out_unit)        # x2 fudge: Mosaic relayout temporaries
    max_bt = budget // (2 * per_bt)          # x2: double buffering
    if max_bt < 1:
        # TODO(synk): tile the inner axes / reuse the narrow-axis strategy for very
        # large or lane-sparse per-example slabs instead of deferring to XLA.
        return jnp.transpose(x, perm)
    slab = math.prod(x.shape[1:]) * itemsize
    bt = int(min(n, max_bt, max(1, _TARGET_BLOCK_BYTES // max(slab, 1))))

    in_block = (bt,) + tuple(x.shape[1:])
    out_block = (bt,) + tuple(out_full_shape[1:])
    return pl.pallas_call(
        _perm_kernel_factory(perm),
        out_shape=jax.ShapeDtypeStruct(out_full_shape, dtype),
        grid_spec=pltpu.PrefetchScalarGridSpec(
            num_scalar_prefetch=0,
            grid=(pl.cdiv(n, bt),),
            in_specs=[pl.BlockSpec(in_block, lambda i: (i,) + (0,) * (ndim - 1))],
            out_specs=pl.BlockSpec(out_block, lambda i: (i,) + (0,) * (ndim - 1)),
        ),
        compiler_params=pltpu.CompilerParams(
            dimension_semantics=("parallel",),
            vmem_limit_bytes=limit,
        ),
        cost_estimate=pl.CostEstimate(
            flops=0, transcendentals=0, bytes_accessed=2 * x.size * itemsize),
    )(x)


# ----------------------------------------------------------------------------- public entry


def pallas_transpose(x, permutation):
    """Equivalent of torch.Tensor.permute(permutation) as a Pallas TPU kernel."""
    perm = tuple(int(p) for p in permutation)
    if sorted(perm) != list(range(x.ndim)):
        raise ValueError(f"invalid permutation {perm} for rank {x.ndim}")
    out_full_shape = tuple(x.shape[p] for p in perm)

    if x.ndim <= 1 or perm == tuple(range(x.ndim)):
        return x                                           # identity permute
    if perm[0] != 0:
        # Prepend a unit batch axis (free reshape) so the batched paths below apply.
        inner = pallas_transpose(x[None], (0,) + tuple(p + 1 for p in perm))
        return inner.reshape(out_full_shape)

    # Longest identity prefix collapses into one batch axis.
    nd = x.ndim
    k = 1
    while k < nd and perm[k] == k:
        k += 1
    if k == nd:
        return x
    # Cyclic block swap after the prefix, e.g. (0, s..nd-1, k..s-1): collapses to a
    # single batched 2-D transpose (N, A, B) -> (N, B, A).
    for s in range(k + 1, nd):
        if perm == tuple(range(k)) + tuple(range(s, nd)) + tuple(range(k, s)):
            return _grouped_swap_transpose(x, k, s, out_full_shape)
    return _batched_perm_transpose(x, perm, out_full_shape)


if __name__ == "__main__":
    key = jax.random.PRNGKey(0)
    x = jax.random.normal(key, (2, 16, 16, 4), dtype=jnp.float32)   # NHWC observations

    # Primary PPO usage: NHWC -> NCHW, Transpose((0, 3, 1, 2)).
    out = jax.block_until_ready(pallas_transpose(x, (0, 3, 1, 2)))
    ref = jnp.transpose(x, (0, 3, 1, 2))
    assert out.shape == (2, 4, 16, 16), out.shape
    assert out.dtype == x.dtype
    assert bool(jnp.array_equal(out, ref)), "NHWC->NCHW mismatch vs reference transpose"

    # Reverse direction (NCHW -> NHWC): exercises the symmetric narrow-axis handling.
    back = jax.block_until_ready(pallas_transpose(ref, (0, 2, 3, 1)))
    assert back.shape == x.shape
    assert bool(jnp.array_equal(back, x)), "NCHW->NHWC mismatch vs reference transpose"

    print("KERNEL_OK")
</pallas_src>

<mosaic_0001>
module attributes {stable_mosaic.version = 11 : i64} {
  func.func @_swap_minor_kernel(%arg0: i32, %arg1: i32, %arg2: i32, %arg3: memref<2x256x4xf32, #tpu.memory_space<vmem>>, %arg4: memref<2x4x256xf32, #tpu.memory_space<vmem>>) attributes {dimension_semantics = [#tpu.dimension_semantics<parallel>, #tpu.dimension_semantics<parallel>, #tpu.dimension_semantics<parallel>], iteration_bounds = array<i64: 1, 1, 1>, scalar_prefetch = 0 : i64, scratch_operands = 0 : i64, tpu.core_type = #tpu.core_type<tc>, window_params = [{transform_indices = @transform_0, window_bounds = array<i64: 2, 256, 4>}, {transform_indices = @transform_1, window_bounds = array<i64: 2, 4, 256>}]} {
    %c0 = arith.constant 0 : index
    %c0_0 = arith.constant 0 : index
    %c0_1 = arith.constant 0 : index
    %0 = vector.load %arg3[%c0, %c0_0, %c0_1] : memref<2x256x4xf32, #tpu.memory_space<vmem>>, vector<2x256x4xf32>
    %1 = tpu.transpose %0, [0, 2, 1] : vector<2x256x4xf32> -> vector<2x4x256xf32>
    %c0_2 = arith.constant 0 : index
    %c0_3 = arith.constant 0 : index
    %c0_4 = arith.constant 0 : index
    %2 = vector.load %arg4[%c0_2, %c0_3, %c0_4] : memref<2x4x256xf32, #tpu.memory_space<vmem>>, vector<2x4x256xf32>
    tpu.vector_store %arg4[%c0_2, %c0_3, %c0_4], %1 {strides = array<i32>} : memref<2x4x256xf32, #tpu.memory_space<vmem>>, vector<2x4x256xf32>,
    return
  }
  func.func @transform_0(%arg0: i32, %arg1: i32, %arg2: i32) -> (i32, i32, i32) {
    %c0_i32 = arith.constant 0 : i32
    return %arg0, %arg1, %arg2 : i32, i32, i32
  }
  func.func @transform_1(%arg0: i32, %arg1: i32, %arg2: i32) -> (i32, i32, i32) {
    %c0_i32 = arith.constant 0 : i32
    return %arg0, %arg2, %arg1 : i32, i32, i32
  }
}

</mosaic_0001>

<llo_original>
// kernel: tpu_custom_call.1
$region0: #{tpu_custom_call.1}
  #allocation0 [shape = 'u32[]', space=smem, size = 0x4, offset = 0x4, fixed_abs, tag = 'smem constant byte address 0x4 - core index']
  #allocation1 [shape = 'u32[72,128]{1,0:T(1,128)}', space=vmem, size = 0x9000, scoped, tag = 'internal scratch']
  %s0 = inlined_call_operand.vmem [shape: f32[2,256,4], index: 0, kind: input, shape index: {}]
  %s1 = inlined_call_operand.hbm [shape: f32[2,4,256], index: 1, kind: output, shape index: {}]
  %s2 = sld [smem:[#allocation0]]
  $region14: #{tpu_custom_call.1} parent=0
    _
  %s4 = ssub.s32 1, %s2
  %s5 = scalar_select 0, %s4, %s2
  $region1: #{tpu_custom_call.1} parent=0
    #allocation2 [shape = 'u8[8192]{0}', space=vmem, size = 0x2000, scoped, tag = 'output window, operand 0, single buffered']
    #allocation3 [shape = 's32[1]{0}', space=sflag, size = 0x4, scoped, tag = 'scoped memory for tpu_custom_call.1']
    %6 = vsyncpa [#allocation3], 0
    // Predicated region
    $region2: #{tpu_custom_call.1} parent=1 // pred_check
      _
    $region3: #{tpu_custom_call.1} parent=1 // pred_check_branch
      %8 = sbr.rel (0) target = $region5
    $region4: #{tpu_custom_call.1} parent=1 // pred_region
      _
    $region5: #{tpu_custom_call.1} parent=1 // pred_fallthru
      _
    %v9 = vld [vmem:[%s0] sm:$0xff]
    %v10 = vld [vmem:[%s0 + $0x8] sm:$0xff]
    %v11 = vld [vmem:[%s0 + $0x10] sm:$0xff]
    %v12 = vld [vmem:[%s0 + $0x18] sm:$0xff]
    %v13 = vld [vmem:[%s0 + $0x20] sm:$0xff]
    %v14 = vld [vmem:[%s0 + $0x28] sm:$0xff]
    %v15 = vld [vmem:[%s0 + $0x30] sm:$0xff]
    %v16 = vld [vmem:[%s0 + $0x38] sm:$0xff]
    %v17 = vld [vmem:[%s0 + $0x40] sm:$0xff]
    %v18 = vld [vmem:[%s0 + $0x48] sm:$0xff]
    %v19 = vld [vmem:[%s0 + $0x50] sm:$0xff]
    %v20 = vld [vmem:[%s0 + $0x58] sm:$0xff]
    %v21 = vld [vmem:[%s0 + $0x60] sm:$0xff]
    %v22 = vld [vmem:[%s0 + $0x68] sm:$0xff]
    %v23 = vld [vmem:[%s0 + $0x70] sm:$0xff]
    %v24 = vld [vmem:[%s0 + $0x78] sm:$0xff]
    %v25 = vld [vmem:[%s0 + $0x80] sm:$0xff]
    %v26 = vld [vmem:[%s0 + $0x88] sm:$0xff]
    %v27 = vld [vmem:[%s0 + $0x90] sm:$0xff]
    %v28 = vld [vmem:[%s0 + $0x98] sm:$0xff]
    %v29 = vld [vmem:[%s0 + $0xa0] sm:$0xff]
    %v30 = vld [vmem:[%s0 + $0xa8] sm:$0xff]
    %v31 = vld [vmem:[%s0 + $0xb0] sm:$0xff]
    %v32 = vld [vmem:[%s0 + $0xb8] sm:$0xff]
    %v33 = vld [vmem:[%s0 + $0xc0] sm:$0xff]
    %v34 = vld [vmem:[%s0 + $0xc8] sm:$0xff]
    %v35 = vld [vmem:[%s0 + $0xd0] sm:$0xff]
    %v36 = vld [vmem:[%s0 + $0xd8] sm:$0xff]
    %v37 = vld [vmem:[%s0 + $0xe0] sm:$0xff]
    %v38 = vld [vmem:[%s0 + $0xe8] sm:$0xff]
    %v39 = vld [vmem:[%s0 + $0xf0] sm:$0xff]
    %v40 = vld [vmem:[%s0 + $0xf8] sm:$0xff]
    %v41 = vld [vmem:[%s0 + $0x100] sm:$0xff]
    %v42 = vld [vmem:[%s0 + $0x108] sm:$0xff]
    %v43 = vld [vmem:[%s0 + $0x110] sm:$0xff]
    %v44 = vld [vmem:[%s0 + $0x118] sm:$0xff]
    %v45 = vld [vmem:[%s0 + $0x120] sm:$0xff]
    %v46 = vld [vmem:[%s0 + $0x128] sm:$0xff]
    %v47 = vld [vmem:[%s0 + $0x130] sm:$0xff]
    %v48 = vld [vmem:[%s0 + $0x138] sm:$0xff]
    %v49 = vld [vmem:[%s0 + $0x140] sm:$0xff]
    %v50 = vld [vmem:[%s0 + $0x148] sm:$0xff]
    %v51 = vld [vmem:[%s0 + $0x150] sm:$0xff]
    %v52 = vld [vmem:[%s0 + $0x158] sm:$0xff]
    %v53 = vld [vmem:[%s0 + $0x160] sm:$0xff]
    %v54 = vld [vmem:[%s0 + $0x168] sm:$0xff]
    %v55 = vld [vmem:[%s0 + $0x170] sm:$0xff]
    %v56 = vld [vmem:[%s0 + $0x178] sm:$0xff]
    %v57 = vld [vmem:[%s0 + $0x180] sm:$0xff]
    %v58 = vld [vmem:[%s0 + $0x188] sm:$0xff]
    %v59 = vld [vmem:[%s0 + $0x190] sm:$0xff]
    %v60 = vld [vmem:[%s0 + $0x198] sm:$0xff]
    %v61 = vld [vmem:[%s0 + $0x1a0] sm:$0xff]
    %v62 = vld [vmem:[%s0 + $0x1a8] sm:$0xff]
    %v63 = vld [vmem:[%s0 + $0x1b0] sm:$0xff]
    %v64 = vld [vmem:[%s0 + $0x1b8] sm:$0xff]
    %v65 = vld [vmem:[%s0 + $0x1c0] sm:$0xff]
    %v66 = vld [vmem:[%s0 + $0x1c8] sm:$0xff]
    %v67 = vld [vmem:[%s0 + $0x1d0] sm:$0xff]
    %v68 = vld [vmem:[%s0 + $0x1d8] sm:$0xff]
    %v69 = vld [vmem:[%s0 + $0x1e0] sm:$0xff]
    %v70 = vld [vmem:[%s0 + $0x1e8] sm:$0xff]
    %v71 = vld [vmem:[%s0 + $0x1f0] sm:$0xff]
    %v72 = vld [vmem:[%s0 + $0x1f8] sm:$0xff]
    %73 = vxpose.xlu0.b32.start [1/16] %v9, 128
    %74 = vxpose.xlu0.b32.cont [2/16] %v10, 128
    %75 = vxpose.xlu0.b32.cont [3/16] %v11, 128
    %76 = vxpose.xlu0.b32.cont [4/16] %v12, 128
    %77 = vxpose.xlu0.b32.cont [5/16] %v13, 128
    %78 = vxpose.xlu0.b32.cont [6/16] %v14, 128
    %79 = vxpose.xlu0.b32.cont [7/16] %v15, 128
    %80 = vxpose.xlu0.b32.cont [8/16] %v16, 128
    %81 = vxpose.xlu0.b32.cont [9/16] %v17, 128
    %82 = vxpose.xlu0.b32.cont [10/16] %v18, 128
    %83 = vxpose.xlu0.b32.cont [11/16] %v19, 128
    %84 = vxpose.xlu0.b32.cont [12/16] %v20, 128
    %85 = vxpose.xlu0.b32.cont [13/16] %v21, 128
    %86 = vxpose.xlu0.b32.cont [14/16] %v22, 128
    %87 = vxpose.xlu0.b32.cont [15/16] %v23, 128
    %88 = vxpose.xlu0.b32.end [16/16] %v24, 128
    %v89 = vpop.trf.xlu0
    %v90 = vpop.trf.xlu0
    %v91 = vpop.trf.xlu0
    %v92 = vpop.trf.xlu0
    %v93 = vpop.trf.xlu0
    %v94 = vpop.trf.xlu0
    %v95 = vpop.trf.xlu0
    %v96 = vpop.trf.xlu0
    %v97 = vpop.trf.xlu0
    %v98 = vpop.trf.xlu0
    %v99 = vpop.trf.xlu0
    %v100 = vpop.trf.xlu0
    %v101 = vpop.trf.xlu0
    %v102 = vpop.trf.xlu0
    %v103 = vpop.trf.xlu0
    %v104 = vpop.trf.xlu0
    %105 = vxpose.xlu0.b32.start [1/16] %v25, 128
    %106 = vxpose.xlu0.b32.cont [2/16] %v26, 128
    %107 = vxpose.xlu0.b32.cont [3/16] %v27, 128
    %108 = vxpose.xlu0.b32.cont [4/16] %v28, 128
    %109 = vxpose.xlu0.b32.cont [5/16] %v29, 128
    %110 = vxpose.xlu0.b32.cont [6/16] %v30, 128
    %111 = vxpose.xlu0.b32.cont [7/16] %v31, 128
    %112 = vxpose.xlu0.b32.cont [8/16] %v32, 128
    %113 = vxpose.xlu0.b32.cont [9/16] %v33, 128
    %114 = vxpose.xlu0.b32.cont [10/16] %v34, 128
    %115 = vxpose.xlu0.b32.cont [11/16] %v35, 128
    %116 = vxpose.xlu0.b32.cont [12/16] %v36, 128
    %117 = vxpose.xlu0.b32.cont [13/16] %v37, 128
    %118 = vxpose.xlu0.b32.cont [14/16] %v38, 128
    %119 = vxpose.xlu0.b32.cont [15/16] %v39, 128
    %120 = vxpose.xlu0.b32.end [16/16] %v40, 128
    %v121 = vpop.trf.xlu0
    %v122 = vpop.trf.xlu0
    %v123 = vpop.trf.xlu0
    %v124 = vpop.trf.xlu0
    %v125 = vpop.trf.xlu0
    %v126 = vpop.trf.xlu0
    %v127 = vpop.trf.xlu0
    %v128 = vpop.trf.xlu0
    %v129 = vpop.trf.xlu0
    %v130 = vpop.trf.xlu0
    %v131 = vpop.trf.xlu0
    %v132 = vpop.trf.xlu0
    %v133 = vpop.trf.xlu0
    %v134 = vpop.trf.xlu0
    %v135 = vpop.trf.xlu0
    %v136 = vpop.trf.xlu0
    %137 = vxpose.xlu0.b32.start [1/16] %v41, 128
    %138 = vxpose.xlu0.b32.cont [2/16] %v42, 128
    %139 = vxpose.xlu0.b32.cont [3/16] %v43, 128
    %140 = vxpose.xlu0.b32.cont [4/16] %v44, 128
    %141 = vxpose.xlu0.b32.cont [5/16] %v45, 128
    %142 = vxpose.xlu0.b32.cont [6/16] %v46, 128
    %143 = vxpose.xlu0.b32.cont [7/16] %v47, 128
    %144 = vxpose.xlu0.b32.cont [8/16] %v48, 128
    %145 = vxpose.xlu0.b32.cont [9/16] %v49, 128
    %146 = vxpose.xlu0.b32.cont [10/16] %v50, 128
    %147 = vxpose.xlu0.b32.cont [11/16] %v51, 128
    %148 = vxpose.xlu0.b32.cont [12/16] %v52, 128
    %149 = vxpose.xlu0.b32.cont [13/16] %v53, 128
    %150 = vxpose.xlu0.b32.cont [14/16] %v54, 128
    %151 = vxpose.xlu0.b32.cont [15/16] %v55, 128
    %152 = vxpose.xlu0.b32.end [16/16] %v56, 128
    %v153 = vpop.trf.xlu0
    %v154 = vpop.trf.xlu0
    %v155 = vpop.trf.xlu0
    %v156 = vpop.trf.xlu0
    %v157 = vpop.trf.xlu0
    %v158 = vpop.trf.xlu0
    %v159 = vpop.trf.xlu0
    %v160 = vpop.trf.xlu0
    %v161 = vpop.trf.xlu0
    %v162 = vpop.trf.xlu0
    %v163 = vpop.trf.xlu0
    %v164 = vpop.trf.xlu0
    %v165 = vpop.trf.xlu0
    %v166 = vpop.trf.xlu0
    %v167 = vpop.trf.xlu0
    %v168 = vpop.trf.xlu0
    %169 = vxpose.xlu0.b32.start [1/16] %v57, 128
    %170 = vxpose.xlu0.b32.cont [2/16] %v58, 128
    %171 = vxpose.xlu0.b32.cont [3/16] %v59, 128
    %172 = vxpose.xlu0.b32.cont [4/16] %v60, 128
    %173 = vxpose.xlu0.b32.cont [5/16] %v61, 128
    %174 = vxpose.xlu0.b32.cont [6/16] %v62, 128
    %175 = vxpose.xlu0.b32.cont [7/16] %v63, 128
    %176 = vxpose.xlu0.b32.cont [8/16] %v64, 128
    %177 = vxpose.xlu0.b32.cont [9/16] %v65, 128
    %178 = vxpose.xlu0.b32.cont [10/16] %v66, 128
    %179 = vxpose.xlu0.b32.cont [11/16] %v67, 128
    %180 = vxpose.xlu0.b32.cont [12/16] %v68, 128
    %181 = vxpose.xlu0.b32.cont [13/16] %v69, 128
    %182 = vxpose.xlu0.b32.cont [14/16] %v70, 128
    %183 = vxpose.xlu0.b32.cont [15/16] %v71, 128
    %184 = vxpose.xlu0.b32.end [16/16] %v72, 128
    %v185 = vpop.trf.xlu0
    %v186 = vpop.trf.xlu0
    %v187 = vpop.trf.xlu0
    %v188 = vpop.trf.xlu0
    %v189 = vpop.trf.xlu0
    %v190 = vpop.trf.xlu0
    %v191 = vpop.trf.xlu0
    %v192 = vpop.trf.xlu0
    %v193 = vpop.trf.xlu0
    %v194 = vpop.trf.xlu0
    %v195 = vpop.trf.xlu0
    %v196 = vpop.trf.xlu0
    %v197 = vpop.trf.xlu0
    %v198 = vpop.trf.xlu0
    %v199 = vpop.trf.xlu0
    %v200 = vpop.trf.xlu0
    %v205 = vrot.slane %v121, 4
    %v206 = vrot.slane %v185, 4
    %vm207 = vcmask 1043456
    %v208 = vsel %vm207, %v89, %v205
    %v209 = vsel %vm207, %v153, %v206
    %212 = vst [vmem:[#allocation2] sm:$0xff] %v208
    %213 = vst [vmem:[#allocation2 + $0x8] sm:$0xff] %v209
    // Predicated region
    $region6: #{tpu_custom_call.1} parent=1 // pred_check
      _
    $region7: #{tpu_custom_call.1} parent=1 // pred_check_branch
      %215 = sbr.rel (0) target = $region9
    $region8: #{tpu_custom_call.1} parent=1 // pred_region
      %217 = vsyncadd [#allocation3], 0
      %s218 = sshll.u32 [#allocation2], 4
      %s219 = int_to_ptr.vmem [resolvable:$true] %s218
      %s220 = sshll.u32 %s1, 4
      %s221 = int_to_ptr.hbm [resolvable:$true] %s220
      %226 = dma.vmem_to_hbm [thread:$0]  %s219, 256, %s221, [#allocation3], 128, 128, 8
    $region9: #{tpu_custom_call.1} parent=1 // pred_fallthru
      _
    // Predicated region
    $region10: #{tpu_custom_call.1} parent=1 // pred_check
      _
    $region11: #{tpu_custom_call.1} parent=1 // pred_check_branch
      %228 = sbr.rel (0) target = $region13
    $region12: #{tpu_custom_call.1} parent=1 // pred_region
      %230 = dma.done [#allocation3], 256
    $region13: #{tpu_custom_call.1} parent=1 // pred_fallthru
      _
    %231 = vsyncpa [#allocation3], 1

</llo_original>
